<compile_context>
chip_gen: v6e
topology: v6e:2x2x1
jax: 0.10.0
libtpu: 0.0.40
codegen_flags: <defaults>
</compile_context>

<pallas_src>
import jax
import jax.numpy as jnp
import numpy as np
from jax.experimental import pallas as pl
from jax.experimental.pallas import tpu as pltpu


# ----------------------------------------------------------------------------- kernel
def _router_loss_partials_kernel(logits_ref, idx_ref, out_ref,
                                 cnt_acc, prob_acc, z_acc):
    t = pl.program_id(1)

    @pl.when(t == 0)
    def _():
        cnt_acc[...] = jnp.zeros_like(cnt_acc)
        prob_acc[...] = jnp.zeros_like(prob_acc)
        z_acc[...] = jnp.zeros_like(z_acc)

    logits = logits_ref[0]                                          # [tT, E] f32
    idx = idx_ref[0]                                                # [tT, 1] int32

    # Shared exp / sum for both logsumexp (z-loss) and softmax (aux-loss).
    m = jnp.max(logits, axis=-1, keepdims=True)                     # [tT, 1]
    ez = jnp.exp(logits - m)                                        # [tT, E]
    s = jnp.sum(ez, axis=-1, keepdims=True)                         # [tT, 1]
    lse = m + jnp.log(s)                                            # [tT, 1]
    z_acc[...] += jnp.sum(lse * lse, keepdims=True)                 # (1, 1)

    probs = ez * pl.reciprocal(s, approx=False)                     # softmax, [tT, E]
    prob_acc[...] += jnp.sum(probs, axis=0, keepdims=True)          # (1, E)

    col = jax.lax.broadcasted_iota(jnp.int32, logits.shape, 1)      # [tT, E]
    one_hot = (col == idx).astype(jnp.float32)                      # [tT, E]
    cnt_acc[...] += jnp.sum(one_hot, axis=0, keepdims=True)         # (1, E)

    @pl.when(t == pl.num_programs(1) - 1)
    def _():
        # per-group aux partial: sum_e counts[e] * prob_sum[e]
        aux_partial = jnp.sum(cnt_acc[...] * prob_acc[...])
        lane = jax.lax.broadcasted_iota(jnp.int32, out_ref.shape, 2)  # (1,1,128)
        out_ref[...] = (jnp.where(lane == 0, z_acc[...].reshape(1, 1, 1), 0.0)
                        + jnp.where(lane == 1, aux_partial, 0.0))


def _choose_t_tile(T: int) -> int:
    """Largest power-of-two tile (multiple of 8 sublanes) dividing T, else full T."""
    for cand in (2048, 1024, 512, 256, 128, 64, 32, 16, 8):
        if T % cand == 0:
            return cand
    return T  # small / ragged T: single full-length block is always legal


def _router_loss_partials(logits, idx):
    """Per-group partials: out[g, 0] = sum_t lse^2, out[g, 1] = dot(counts_g, prob_sum_g)."""
    G, T, E = logits.shape
    tT = _choose_t_tile(T)
    nt = T // tT

    out = pl.pallas_call(
        _router_loss_partials_kernel,
        out_shape=jax.ShapeDtypeStruct((G, 1, 128), jnp.float32),    # lane-dense slab
        grid_spec=pltpu.PrefetchScalarGridSpec(
            num_scalar_prefetch=0,
            grid=(G, nt),
            in_specs=[
                pl.BlockSpec((1, tT, E), lambda g, t: (g, t, 0)),    # logits tile
                pl.BlockSpec((1, tT, 1), lambda g, t: (g, t, 0)),    # expert index tile
            ],
            out_specs=pl.BlockSpec((1, 1, 128), lambda g, t: (g, 0, 0)),
            scratch_shapes=[
                pltpu.VMEM((1, E), jnp.float32),   # token counts per expert
                pltpu.VMEM((1, E), jnp.float32),   # softmax prob sums per expert
                pltpu.VMEM((1, 1), jnp.float32),   # running sum of logsumexp^2
            ],
        ),
        compiler_params=pltpu.CompilerParams(
            dimension_semantics=("parallel", "arbitrary"),
            vmem_limit_bytes=32 * 1024 * 1024,
        ),
    )(logits, idx[..., None])
    return out[:, 0, :]                                              # (G, 128)


# ----------------------------------------------------------------------------- wrapper
def switch_unpack_router_logits(router_outputs):
    """Mirror of _switch_unpack_router_logits (host-side Python list handling)."""
    total_logits, total_idx = [], []
    for router_output in router_outputs:
        if router_output[0].ndim > 1:
            total_logits.append(router_output[0])
            total_idx.append(router_output[1])
    return (jnp.concatenate(total_logits, axis=1),
            jnp.concatenate(total_idx, axis=1))


def switch_router_loss(router_outputs, *, router_z_loss_coef, router_aux_loss_coef):
    router_logits, expert_indexes = switch_unpack_router_logits(router_outputs)
    G, T, E = router_logits.shape
    partials = _router_loss_partials(router_logits.astype(jnp.float32),
                                     expert_indexes.astype(jnp.int32))
    z_loss = jnp.sum(partials[:, 0]) / (G * T)
    # mean_{g,e}((cnt/T) * (psum/T)) * E^2 == sum_g dot(cnt_g, psum_g) * E / (G*T^2)
    aux_loss = jnp.sum(partials[:, 1]) * E / (G * T * T)
    return router_z_loss_coef * z_loss + router_aux_loss_coef * aux_loss


# ----------------------------------------------------------------------------- reference
def reference_loss(router_outputs, z_coef, aux_coef):
    """Pure-JAX mirror of the torch SwitchRouterLoss.forward."""
    logits, idx = switch_unpack_router_logits(router_outputs)
    G, T, E = logits.shape
    m = jnp.max(logits, axis=-1)
    lse = m + jnp.log(jnp.sum(jnp.exp(logits - m[..., None]), axis=-1))
    z_loss = jnp.sum(lse ** 2) / (G * T)
    probs = jax.nn.softmax(logits, axis=-1)
    expert_mask = jax.nn.one_hot(idx.astype(jnp.int32), E, dtype=jnp.float32)
    tokens_per = jnp.mean(expert_mask, axis=-2)          # [G, E]
    prob_per = jnp.mean(probs, axis=-2)                  # [G, E]
    aux_loss = jnp.mean(tokens_per * prob_per) * E ** 2
    return z_coef * z_loss + aux_coef * aux_loss


# ----------------------------------------------------------------------------- main
if __name__ == "__main__":
    NUM_LAYERS, G, T_PER_LAYER, E = 3, 2, 8, 4
    Z_COEF, AUX_COEF = 0.001, 0.002

    key = jax.random.PRNGKey(0)
    router_outputs = []
    for _ in range(NUM_LAYERS):
        key, k_logit, k_idx = jax.random.split(key, 3)
        layer_logits = jax.random.normal(k_logit, (G, T_PER_LAYER, E), jnp.float32)
        layer_idx = jax.random.randint(k_idx, (G, T_PER_LAYER), 0, E, jnp.int32)
        router_outputs.append((layer_logits, layer_idx))
    # a layer that produced no router output (1-D placeholder) -> filtered by unpack
    router_outputs.insert(1, (jnp.zeros((1,), jnp.float32), jnp.zeros((1,), jnp.int32)))

    loss = switch_router_loss(router_outputs,
                              router_z_loss_coef=Z_COEF,
                              router_aux_loss_coef=AUX_COEF)
    jax.block_until_ready(loss)

    ref = reference_loss(router_outputs, Z_COEF, AUX_COEF)
    np.testing.assert_allclose(np.asarray(loss), np.asarray(ref), rtol=1e-5, atol=1e-6)
    assert loss.shape == ()
    print("KERNEL_OK")
</pallas_src>

<mosaic_0001>
module attributes {stable_mosaic.version = 11 : i64} {
  func.func @_router_loss_partials_kernel(%arg0: i32, %arg1: i32, %arg2: memref<1x8x4xf32, #tpu.memory_space<vmem>>, %arg3: memref<1x8x1xi32, #tpu.memory_space<vmem>>, %arg4: memref<1x1x128xf32, #tpu.memory_space<vmem>>, %arg5: memref<1x4xf32, #tpu.memory_space<vmem>>, %arg6: memref<1x4xf32, #tpu.memory_space<vmem>>, %arg7: memref<1x1xf32, #tpu.memory_space<vmem>>) attributes {dimension_semantics = [#tpu.dimension_semantics<parallel>, #tpu.dimension_semantics<arbitrary>], iteration_bounds = array<i64: 2, 3>, scalar_prefetch = 0 : i64, scratch_operands = 3 : i64, tpu.core_type = #tpu.core_type<tc>, window_params = [{transform_indices = @transform_0, window_bounds = array<i64: 1, 8, 4>}, {transform_indices = @transform_1, window_bounds = array<i64: 1, 8, 1>}, {transform_indices = @transform_2, window_bounds = array<i64: 1, 1, 128>}]} {
    %c0_i32 = arith.constant 0 : i32
    %0 = arith.cmpi eq, %arg1, %c0_i32 : i32
    %1 = arith.extui %0 : i1 to i32
    %c0_i32_0 = arith.constant 0 : i32
    %2 = arith.cmpi ne, %1, %c0_i32_0 : i32
    scf.if %2 {
      %cst_23 = arith.constant 0.000000e+00 : f32
      %46 = vector.broadcast %cst_23 : f32 to vector<1x4xf32>
      %c0_24 = arith.constant 0 : index
      %c0_25 = arith.constant 0 : index
      %47 = vector.load %arg5[%c0_24, %c0_25] : memref<1x4xf32, #tpu.memory_space<vmem>>, vector<1x4xf32>
      tpu.vector_store %arg5[%c0_24, %c0_25], %46 {strides = array<i32>} : memref<1x4xf32, #tpu.memory_space<vmem>>, vector<1x4xf32>,
      %cst_26 = arith.constant 0.000000e+00 : f32
      %48 = vector.broadcast %cst_26 : f32 to vector<1x4xf32>
      %c0_27 = arith.constant 0 : index
      %c0_28 = arith.constant 0 : index
      %49 = vector.load %arg6[%c0_27, %c0_28] : memref<1x4xf32, #tpu.memory_space<vmem>>, vector<1x4xf32>
      tpu.vector_store %arg6[%c0_27, %c0_28], %48 {strides = array<i32>} : memref<1x4xf32, #tpu.memory_space<vmem>>, vector<1x4xf32>,
      %cst_29 = arith.constant 0.000000e+00 : f32
      %50 = vector.broadcast %cst_29 : f32 to vector<1x1xf32>
      %c0_30 = arith.constant 0 : index
      %c0_31 = arith.constant 0 : index
      %51 = vector.load %arg7[%c0_30, %c0_31] : memref<1x1xf32, #tpu.memory_space<vmem>>, vector<1x1xf32>
      tpu.vector_store %arg7[%c0_30, %c0_31], %50 {strides = array<i32>} : memref<1x1xf32, #tpu.memory_space<vmem>>, vector<1x1xf32>,
    } else {
    }
    %c0 = arith.constant 0 : index
    %c0_1 = arith.constant 0 : index
    %c0_2 = arith.constant 0 : index
    %3 = vector.load %arg2[%c0, %c0_1, %c0_2] : memref<1x8x4xf32, #tpu.memory_space<vmem>>, vector<1x8x4xf32>
    %4 = vector.shape_cast %3 : vector<1x8x4xf32> to vector<8x4xf32>
    %c0_3 = arith.constant 0 : index
    %c0_4 = arith.constant 0 : index
    %c0_5 = arith.constant 0 : index
    %5 = vector.load %arg3[%c0_3, %c0_4, %c0_5] : memref<1x8x1xi32, #tpu.memory_space<vmem>>, vector<1x8x1xi32>
    %6 = vector.shape_cast %5 : vector<1x8x1xi32> to vector<8x1xi32>
    %cst = arith.constant dense<0xFF800000> : vector<8xf32>
    %7 = vector.multi_reduction <maximumf>, %4, %cst [1] : vector<8x4xf32> to vector<8xf32>
    %8 = vector.shape_cast %7 : vector<8xf32> to vector<8x1xf32>
    %9 = vector.broadcast %8 : vector<8x1xf32> to vector<8x4xf32>
    %10 = arith.subf %4, %9 : vector<8x4xf32>
    %11 = math.exp %10 : vector<8x4xf32>
    %cst_6 = arith.constant dense<0.000000e+00> : vector<8xf32>
    %12 = vector.multi_reduction <add>, %11, %cst_6 [1] : vector<8x4xf32> to vector<8xf32>
    %13 = vector.shape_cast %12 : vector<8xf32> to vector<8x1xf32>
    %14 = math.log %13 : vector<8x1xf32>
    %15 = arith.addf %8, %14 : vector<8x1xf32>
    %c0_7 = arith.constant 0 : index
    %c0_8 = arith.constant 0 : index
    %16 = vector.load %arg7[%c0_7, %c0_8] : memref<1x1xf32, #tpu.memory_space<vmem>>, vector<1x1xf32>
    %17 = arith.mulf %15, %15 : vector<8x1xf32>
    %18 = vector.shape_cast %17 : vector<8x1xf32> to vector<1x8x1xf32>
    %cst_9 = arith.constant dense<0.000000e+00> : vector<1xf32>
    %19 = vector.multi_reduction <add>, %18, %cst_9 [1, 2] : vector<1x8x1xf32> to vector<1xf32>
    %20 = vector.shape_cast %19 : vector<1xf32> to vector<1x1x1xf32>
    %21 = vector.extract %20[0, 0, 0] : f32 from vector<1x1x1xf32>
    %22 = vector.broadcast %21 : f32 to vector<1x1xf32>
    %23 = arith.addf %16, %22 : vector<1x1xf32>
    %c0_10 = arith.constant 0 : index
    %c0_11 = arith.constant 0 : index
    %24 = vector.load %arg7[%c0_10, %c0_11] : memref<1x1xf32, #tpu.memory_space<vmem>>, vector<1x1xf32>
    tpu.vector_store %arg7[%c0_10, %c0_11], %23 {strides = array<i32>} : memref<1x1xf32, #tpu.memory_space<vmem>>, vector<1x1xf32>,
    %25 = tpu.reciprocal %13 : vector<8x1xf32> -> vector<8x1xf32>
    %26 = vector.broadcast %25 : vector<8x1xf32> to vector<8x4xf32>
    %27 = arith.mulf %11, %26 : vector<8x4xf32>
    %c0_12 = arith.constant 0 : index
    %c0_13 = arith.constant 0 : index
    %28 = vector.load %arg6[%c0_12, %c0_13] : memref<1x4xf32, #tpu.memory_space<vmem>>, vector<1x4xf32>
    %cst_14 = arith.constant dense<0.000000e+00> : vector<4xf32>
    %29 = vector.multi_reduction <add>, %27, %cst_14 [0] : vector<8x4xf32> to vector<4xf32>
    %30 = vector.shape_cast %29 : vector<4xf32> to vector<1x4xf32>
    %31 = arith.addf %28, %30 : vector<1x4xf32>
    %c0_15 = arith.constant 0 : index
    %c0_16 = arith.constant 0 : index
    %32 = vector.load %arg6[%c0_15, %c0_16] : memref<1x4xf32, #tpu.memory_space<vmem>>, vector<1x4xf32>
    tpu.vector_store %arg6[%c0_15, %c0_16], %31 {strides = array<i32>} : memref<1x4xf32, #tpu.memory_space<vmem>>, vector<1x4xf32>,
    %33 = tpu.iota {dimensions = array<i32: 1>} : vector<8x4xi32>
    %34 = vector.broadcast %6 : vector<8x1xi32> to vector<8x4xi32>
    %35 = arith.cmpi eq, %33, %34 : vector<8x4xi32>
    %36 = arith.extui %35 : vector<8x4xi1> to vector<8x4xi32>
    %37 = arith.sitofp %36 : vector<8x4xi32> to vector<8x4xf32>
    %c0_17 = arith.constant 0 : index
    %c0_18 = arith.constant 0 : index
    %38 = vector.load %arg5[%c0_17, %c0_18] : memref<1x4xf32, #tpu.memory_space<vmem>>, vector<1x4xf32>
    %cst_19 = arith.constant dense<0.000000e+00> : vector<4xf32>
    %39 = vector.multi_reduction <add>, %37, %cst_19 [0] : vector<8x4xf32> to vector<4xf32>
    %40 = vector.shape_cast %39 : vector<4xf32> to vector<1x4xf32>
    %41 = arith.addf %38, %40 : vector<1x4xf32>
    %c0_20 = arith.constant 0 : index
    %c0_21 = arith.constant 0 : index
    %42 = vector.load %arg5[%c0_20, %c0_21] : memref<1x4xf32, #tpu.memory_space<vmem>>, vector<1x4xf32>
    tpu.vector_store %arg5[%c0_20, %c0_21], %41 {strides = array<i32>} : memref<1x4xf32, #tpu.memory_space<vmem>>, vector<1x4xf32>,
    %c2_i32 = arith.constant 2 : i32
    %43 = arith.cmpi eq, %arg1, %c2_i32 : i32
    %44 = arith.extui %43 : i1 to i32
    %c0_i32_22 = arith.constant 0 : i32
    %45 = arith.cmpi ne, %44, %c0_i32_22 : i32
    scf.if %45 {
      %c0_23 = arith.constant 0 : index
      %c0_24 = arith.constant 0 : index
      %46 = vector.load %arg5[%c0_23, %c0_24] : memref<1x4xf32, #tpu.memory_space<vmem>>, vector<1x4xf32>
      %c0_25 = arith.constant 0 : index
      %c0_26 = arith.constant 0 : index
      %47 = vector.load %arg6[%c0_25, %c0_26] : memref<1x4xf32, #tpu.memory_space<vmem>>, vector<1x4xf32>
      %48 = arith.mulf %46, %47 : vector<1x4xf32>
      %49 = vector.shape_cast %48 : vector<1x4xf32> to vector<1x1x4xf32>
      %cst_27 = arith.constant dense<0.000000e+00> : vector<1xf32>
      %50 = vector.multi_reduction <add>, %49, %cst_27 [1, 2] : vector<1x1x4xf32> to vector<1xf32>
      %51 = vector.shape_cast %50 : vector<1xf32> to vector<1x1x1xf32>
      %52 = vector.extract %51[0, 0, 0] : f32 from vector<1x1x1xf32>
      %53 = tpu.iota {dimensions = array<i32: 2>} : vector<1x1x128xi32>
      %c0_i32_28 = arith.constant 0 : i32
      %54 = vector.broadcast %c0_i32_28 : i32 to vector<1x1x128xi32>
      %55 = arith.cmpi eq, %53, %54 : vector<1x1x128xi32>
      %c0_29 = arith.constant 0 : index
      %c0_30 = arith.constant 0 : index
      %56 = vector.load %arg7[%c0_29, %c0_30] : memref<1x1xf32, #tpu.memory_space<vmem>>, vector<1x1xf32>
      %57 = vector.shape_cast %56 : vector<1x1xf32> to vector<1x1x1xf32>
      %cst_31 = arith.constant 0.000000e+00 : f32
      %58 = vector.shape_cast %57 : vector<1x1x1xf32> to vector<1x1x1xf32>
      %59 = vector.broadcast %58 : vector<1x1x1xf32> to vector<1x1x128xf32>
      %60 = vector.broadcast %cst_31 : f32 to vector<1x1x128xf32>
      %61 = arith.select %55, %59, %60 : vector<1x1x128xi1>, vector<1x1x128xf32>
      %c1_i32 = arith.constant 1 : i32
      %62 = vector.broadcast %c1_i32 : i32 to vector<1x1x128xi32>
      %63 = arith.cmpi eq, %53, %62 : vector<1x1x128xi32>
      %cst_32 = arith.constant 0.000000e+00 : f32
      %64 = vector.broadcast %52 : f32 to vector<1x1x128xf32>
      %65 = vector.broadcast %cst_32 : f32 to vector<1x1x128xf32>
      %66 = arith.select %63, %64, %65 : vector<1x1x128xi1>, vector<1x1x128xf32>
      %67 = arith.addf %61, %66 : vector<1x1x128xf32>
      %c0_33 = arith.constant 0 : index
      %c0_34 = arith.constant 0 : index
      %c0_35 = arith.constant 0 : index
      %68 = vector.load %arg4[%c0_33, %c0_34, %c0_35] : memref<1x1x128xf32, #tpu.memory_space<vmem>>, vector<1x1x128xf32>
      tpu.vector_store %arg4[%c0_33, %c0_34, %c0_35], %67 {strides = array<i32>} : memref<1x1x128xf32, #tpu.memory_space<vmem>>, vector<1x1x128xf32>,
    } else {
    }
    return
  }
  func.func @transform_0(%arg0: i32, %arg1: i32) -> (i32, i32, i32) {
    %c0_i32 = arith.constant 0 : i32
    %c0_i32_0 = arith.constant 0 : i32
    return %arg0, %arg1, %c0_i32 : i32, i32, i32
  }
  func.func @transform_1(%arg0: i32, %arg1: i32) -> (i32, i32, i32) {
    %c0_i32 = arith.constant 0 : i32
    %c0_i32_0 = arith.constant 0 : i32
    return %arg0, %arg1, %c0_i32 : i32, i32, i32
  }
  func.func @transform_2(%arg0: i32, %arg1: i32) -> (i32, i32, i32) {
    %c0_i32 = arith.constant 0 : i32
    %c0_i32_0 = arith.constant 0 : i32
    %c0_i32_1 = arith.constant 0 : i32
    return %arg0, %c0_i32, %c0_i32_0 : i32, i32, i32
  }
}

</mosaic_0001>

<llo_original>
// kernel: tpu_custom_call.1
$region0: #{tpu_custom_call.1}
  #allocation0 [shape = 'u32[]', space=smem, size = 0x4, offset = 0x4, fixed_abs, tag = 'smem constant byte address 0x4 - core index']
  #allocation1 [shape = 'u32[144,128]{1,0:T(1,128)}', space=vmem, size = 0x12000, scoped, tag = 'internal scratch']
  #allocation2 [shape = 'f32[1,4]{1,0:T(1,128)}', space=vmem, size = 0x200, scoped, tag = 'scratch operand']
  #allocation3 [shape = 'f32[1,4]{1,0:T(1,128)}', space=vmem, size = 0x200, scoped, tag = 'scratch operand']
  #allocation4 [shape = 'f32[1,1]{1,0:T(1,128)}', space=vmem, size = 0x200, scoped, tag = 'scratch operand']
  %s0 = inlined_call_operand.vmem [shape: f32[2,24,4], index: 0, kind: input, shape index: {}]
  %s1 = inlined_call_operand.vmem [shape: s32[2,24,1], index: 1, kind: input, shape index: {}]
  %s2 = inlined_call_operand.hbm [shape: f32[2,1,128], index: 2, kind: output, shape index: {}]
  %s3 = sld [smem:[#allocation0]]
  $region49: #{tpu_custom_call.1} parent=0
    _
  %s5 = ssub.s32 1, %s3
  %s6 = scalar_select 0, %s5, %s3
  $region1: #{tpu_custom_call.1} parent=0
    #allocation5 [shape = 'u8[1024]{0}', space=vmem, size = 0x400, scoped, tag = 'output window, operand 0']
    #allocation6 [shape = 's32[2]{0}', space=sflag, size = 0x8, scoped, tag = 'scoped memory for tpu_custom_call.1']
    %7 = vsyncpa [#allocation6], 0
    %s8 = scalar_lea.sflag [#allocation6], 1
    %9 = vsyncpa %s8, 0
    loop: start=0, step=1, limit=8
    $region2: #{tpu_custom_call.1} parent=1 // loop_pre_header
      _
    $region3: #{tpu_custom_call.1} parent=1 // loop_header
      %s11 = sphi 0, %s15
      %p12 = scmp.ge.s32.totalorder %s11, 8
      %s18 = sphi 0, %s30
      %s19 = sphi 0, %s26
      %s20 = sphi 0, %s18
      %s21 = sphi 0, %s19
      %s22 = sphi 0, %s20
      %s23 = sphi 0, %s21
      %s35 = sphi 0, %s37
      %s38 = sphi 0, %s35
      %s39 = sphi 0, %s38
      %s55 = sphi 0, %s39
      %s63 = sphi 0, %s65
      %s66 = sphi 0, %s63
      %s67 = sphi 0, %s66
      %s83 = sphi 0, %s67
      %s89 = sphi 0, %s91
      %s92 = sphi 0, %s89
      %s93 = sphi 0, %s92
      %s109 = sphi 0, %s93
    $region4: #{tpu_custom_call.1} parent=1 // loop_header_branch
      %14 = sbr.rel (%p12) target = $region8
    $region5: #{tpu_custom_call.1} parent=1 // loop_body
      %s16 = ssub.s32 %s11, 1
      %s17 = ssub.s32 %s11, 2
      %s24 = sadd.s32 1, %s19
      %p25 = scmp.ge.s32.totalorder %s24, 3
      %s26 = scalar_select %p25, 0, %s24
      %s27 = sadd.s32 1, %s18
      %s28 = scalar_select %p25, %s27, %s18
      %p29 = scmp.ge.s32.totalorder %s28, 2
      %s30 = scalar_select %p29, 0, %s28
      %s31 = ssub.s32 %s18, %s30
      %s32 = ssub.s32 %s19, %s26
      %s33 = sor.u32 %s31, %s32
      %p34 = scmp.eq.s32.totalorder %s33, 0
      %s36 = sadd.s32 %s35, 1
      %s37 = scalar_select %p34, %s35, %s36
      %p40 = pneg %p34
      %p41 = scmp.eq.s32.totalorder %s11, 5
      %p42 = por %p40, %p41
      %p43 = scmp.ne.s32.totalorder %s35, %s38
      %p44 = scmp.eq.s32.totalorder %s11, 0
      %p45 = por %p43, %p44
      %p46 = scmp.ne.s32.totalorder %s35, %s38
      %p47 = scmp.eq.s32.totalorder %s16, 5
      %p48 = por %p46, %p47
      %p49 = scmp.ne.s32.totalorder %s38, %s39
      %p50 = scmp.eq.s32.totalorder %s16, 0
      %p51 = por %p49, %p50
      %p52 = scmp.ne.s32.totalorder %s38, %s39
      %p53 = scmp.eq.s32.totalorder %s17, 5
      %p54 = por %p52, %p53
      %p56 = scmp.ne.s32.totalorder %s39, %s55
      %p57 = scmp.eq.s32.totalorder %s17, 0
      %p58 = por %p56, %p57
      %s59 = ssub.s32 %s18, %s30
      %s60 = ssub.s32 %s19, %s26
      %s61 = sor.u32 %s59, %s60
      %p62 = scmp.eq.s32.totalorder %s61, 0
      %s64 = sadd.s32 %s63, 1
      %s65 = scalar_select %p62, %s63, %s64
      %p68 = pneg %p62
      %p69 = scmp.eq.s32.totalorder %s11, 5
      %p70 = por %p68, %p69
      %p71 = scmp.ne.s32.totalorder %s63, %s66
      %p72 = scmp.eq.s32.totalorder %s11, 0
      %p73 = por %p71, %p72
      %p74 = scmp.ne.s32.totalorder %s63, %s66
      %p75 = scmp.eq.s32.totalorder %s16, 5
      %p76 = por %p74, %p75
      %p77 = scmp.ne.s32.totalorder %s66, %s67
      %p78 = scmp.eq.s32.totalorder %s16, 0
      %p79 = por %p77, %p78
      %p80 = scmp.ne.s32.totalorder %s66, %s67
      %p81 = scmp.eq.s32.totalorder %s17, 5
      %p82 = por %p80, %p81
      %p84 = scmp.ne.s32.totalorder %s67, %s83
      %p85 = scmp.eq.s32.totalorder %s17, 0
      %p86 = por %p84, %p85
      %s87 = ssub.s32 %s18, %s30
      %p88 = scmp.eq.s32.totalorder %s87, 0
      %s90 = sadd.s32 %s89, 1
      %s91 = scalar_select %p88, %s89, %s90
      %p94 = pneg %p88
      %p95 = scmp.eq.s32.totalorder %s11, 5
      %p96 = por %p94, %p95
      %p97 = scmp.ne.s32.totalorder %s89, %s92
      %p98 = scmp.eq.s32.totalorder %s11, 0
      %p99 = por %p97, %p98
      %p100 = scmp.ne.s32.totalorder %s89, %s92
      %p101 = scmp.eq.s32.totalorder %s16, 5
      %p102 = por %p100, %p101
      %p103 = scmp.ne.s32.totalorder %s92, %s93
      %p104 = scmp.eq.s32.totalorder %s16, 0
      %p105 = por %p103, %p104
      %p106 = scmp.ne.s32.totalorder %s92, %s93
      %p107 = scmp.eq.s32.totalorder %s17, 5
      %p108 = por %p106, %p107
      %p110 = scmp.ne.s32.totalorder %s93, %s109
      %p111 = scmp.eq.s32.totalorder %s17, 0
      %p112 = por %p110, %p111
      %p113 = scmp.le.s32.totalorder 1, %s11
      %p114 = scmp.lt.s32.totalorder %s11, 7
      %p115 = pnand %p113, %p114
      %p116 = pneg %p115
      // Predicated region
      $region9: #{tpu_custom_call.1} parent=5 // pred_check
        _
      $region10: #{tpu_custom_call.1} parent=5 // pred_check_branch
        %118 = sbr.rel (%p115) target = $region12
      $region11: #{tpu_custom_call.1} parent=5 // pred_region
        %s119 = ssub.s32 %s11, 1
      $region12: #{tpu_custom_call.1} parent=5 // pred_fallthru
        _
      %p120 = scmp.lt.s32.totalorder %s11, 6
      // Predicated region
      $region13: #{tpu_custom_call.1} parent=5 // pred_check
        %p121 = pneg %p120
      $region14: #{tpu_custom_call.1} parent=5 // pred_check_branch
        %123 = sbr.rel (%p121) target = $region16
      $region15: #{tpu_custom_call.1} parent=5 // pred_region
        // Predicated region
        $region17: #{tpu_custom_call.1} parent=15 // pred_check
          %p124 = pneg %p45
        $region18: #{tpu_custom_call.1} parent=15 // pred_check_branch
          %126 = sbr.rel (%p124) target = $region20
        $region19: #{tpu_custom_call.1} parent=15 // pred_region
          %p127 = scmp.lt.s32.totalorder %s18, 1
          %s128 = scalar_select %p127, %s18, 1
          %p129 = scmp.lt.s32.totalorder %s19, 2
          %s130 = scalar_select %p129, %s19, 2
          %s131 = smul.addr %s128, 3
          %s132 = sadd.s32 %s130, %s131
          %s133 = smul.addr %s132, 8
          %s134 = scalar_lea.vmem %s0, %s133
        $region20: #{tpu_custom_call.1} parent=15 // pred_fallthru
          _
        // Predicated region
        $region21: #{tpu_custom_call.1} parent=15 // pred_check
          %p135 = pneg %p73
        $region22: #{tpu_custom_call.1} parent=15 // pred_check_branch
          %137 = sbr.rel (%p135) target = $region24
        $region23: #{tpu_custom_call.1} parent=15 // pred_region
          %p138 = scmp.lt.s32.totalorder %s18, 1
          %s139 = scalar_select %p138, %s18, 1
          %p140 = scmp.lt.s32.totalorder %s19, 2
          %s141 = scalar_select %p140, %s19, 2
          %s142 = smul.addr %s139, 3
          %s143 = sadd.s32 %s141, %s142
          %s144 = smul.addr %s143, 8
          %s145 = scalar_lea.vmem %s1, %s144
        $region24: #{tpu_custom_call.1} parent=15 // pred_fallthru
          _
      $region16: #{tpu_custom_call.1} parent=5 // pred_fallthru
        _
      %p146 = scmp.le.s32.totalorder 1, %s11
      %p147 = scmp.lt.s32.totalorder %s11, 7
      %p148 = pnand %p146, %p147
      %p149 = pneg %p148
      // Predicated region
      $region25: #{tpu_custom_call.1} parent=5 // pred_check
        _
      $region26: #{tpu_custom_call.1} parent=5 // pred_check_branch
        %151 = sbr.rel (%p148) target = $region28
      $region27: #{tpu_custom_call.1} parent=5 // pred_region
        %s152 = ssub.s32 %s11, 1
        %p153 = scmp.lt.s32.totalorder %s20, 1
        %s154 = scalar_select %p153, %s20, 1
        %p155 = scmp.lt.s32.totalorder %s21, 2
        %s156 = scalar_select %p155, %s21, 2
        %s157 = smul.addr %s154, 3
        %s158 = sadd.s32 %s156, %s157
        %s159 = smul.addr %s158, 8
        %s160 = scalar_lea.vmem %s0, %s159
        %p161 = pneg %p51
        %p162 = pneg %p48
        %p163 = scmp.lt.s32.totalorder %s20, 1
        %s164 = scalar_select %p163, %s20, 1
        %p165 = scmp.lt.s32.totalorder %s21, 2
        %s166 = scalar_select %p165, %s21, 2
        %s167 = smul.addr %s164, 3
        %s168 = sadd.s32 %s166, %s167
        %s169 = smul.addr %s168, 8
        %s170 = scalar_lea.vmem %s1, %s169
        %p171 = pneg %p79
        %p172 = pneg %p76
        %p173 = pneg %p105
        %p174 = pneg %p102
        %s175 = sand.u32 %s92, 1
        %s176 = scalar_lea.sflag [#allocation6], %s175
        %s177 = sand.u32 %s92, 1
        %s178 = scalar_lea.vmem [#allocation5], %s177
        %p179 = scmp.lt.s32.totalorder %s20, 1
        %s180 = scalar_select %p179, %s20, 1
        %p181 = scmp.lt.s32.totalorder %s21, 2
        %s182 = scalar_select %p181, %s21, 2
        %s183 = smul.addr %s180, 3
        %s184 = sadd.s32 %s182, %s183
        %s185 = smul.addr %s184, 8
        %s186 = scalar_lea.vmem %s0, %s185
        %p187 = scmp.lt.s32.totalorder %s20, 1
        %s188 = scalar_select %p187, %s20, 1
        %p189 = scmp.lt.s32.totalorder %s21, 2
        %s190 = scalar_select %p189, %s21, 2
        %s191 = smul.addr %s188, 3
        %s192 = sadd.s32 %s190, %s191
        %s193 = smul.addr %s192, 8
        %s194 = scalar_lea.vmem %s1, %s193
        %p195 = scmp.eq.s32.totalorder %s21, 0
        // Predicated region
        $region29: #{tpu_custom_call.1} parent=27 // pred_check
          %p196 = pneg %p195
        $region30: #{tpu_custom_call.1} parent=27 // pred_check_branch
          %198 = sbr.rel (%p196) target = $region32
        $region31: #{tpu_custom_call.1} parent=27 // pred_region
          %vm199 = vcmask 24576
          %200 = vst.msk [vmem:[#allocation2] sm:$0x1] %vm199, 0.0
          %201 = vst.msk [vmem:[#allocation3] sm:$0x1] %vm199, 0.0
          %vm202 = vcmask 0
          %203 = vst.msk [vmem:[#allocation4] sm:$0x1] %vm202, 0.0
        $region32: #{tpu_custom_call.1} parent=27 // pred_fallthru
          _
        %v204 = vld [vmem:[%s186] sm:$0xff]
        %v205 = vld [vmem:[%s194] sm:$0xff]
        %vm206 = vcmask 31744
        %v207 = vsel %vm206, %v204, -inf
        %208 = vmax.xlane.f32.xlu0 %v207
        %v209 = vpop.xlane.xlu0 %208
        %v210 = vsub.f32 %v204, %v209
        %v211 = vmul.f32 %v210, 1.442695
        %v212 = vpow.pop %v211
        %v213 = vsel %vm206, %v212, 0.0
        %214 = vadd.xlane.f32.xlu0 %v213
        %v215 = vpop.xlane.xlu0 %214
        %v216 = vlog2.pop %v215
        %v217 = vmul.f32 %v216, 0.6931472
        %v218 = vadd.f32 %v209, %v217
        %v219 = vld [vmem:[#allocation4] sm:$0x1]
        %v220 = vmul.f32 %v218, %v218
        %vm221 = vcmask 7168
        %v222 = vsel %vm221, %v220, 0.0
        %223 = vadd.xlane.f32.xlu0 %v222
        %v224 = vpop.xlane.xlu0 %223
        %v225 = vrot.slane %v224, 4
        %v226 = vadd.f32 %v224, %v225
        %v227 = vrot.slane %v226, 2
        %v228 = vadd.f32 %v226, %v227
        %v229 = vrot.slane %v228, 1
        %v230 = vadd.f32 %v228, %v229
        %s231 = vtos %v230
        %v232 = vstv %s231
        %v233 = vadd.f32 %v219, %v232
        %vm234 = vcmask 0
        %235 = vst.msk [vmem:[#allocation4] sm:$0x1] %vm234, %v233
        %v236 = vrcp.pop %v215
        %v237 = vmul.f32 %v212, %v236
        %v238 = vld [vmem:[#allocation3] sm:$0x1]
        %v239 = vsel %vm206, %v237, 0.0
        %v240 = vrot.slane %v239, 4
        %v241 = vadd.f32 %v239, %v240
        %v242 = vrot.slane %v241, 2
        %v243 = vadd.f32 %v241, %v242
        %v244 = vrot.slane %v243, 1
        %v245 = vadd.f32 %v243, %v244
        %v246 = vadd.f32 %v238, %v245
        %vm247 = vcmask 24576
        %248 = vst.msk [vmem:[#allocation3] sm:$0x1] %vm247, %v246
        %v249 = vlaneseq
        %v250 = vand.u32 %v249, 127
        %251 = vset.pattern.permute.xlu0 0
        %252 = vperm.xlu0 %251, %v205
        %v253 = vpop.permute.xlu0 %252
        %vm254 = vcmp.eq.s32.totalorder %v250, %v253
        %v255 = vsel %vm254, 1, 0
        %v256 = vcvt.s32.f32 %v255
        %v257 = vld [vmem:[#allocation2] sm:$0x1]
        %v258 = vsel %vm206, %v256, 0.0
        %v259 = vrot.slane %v258, 4
        %v260 = vadd.f32 %v258, %v259
        %v261 = vrot.slane %v260, 2
        %v262 = vadd.f32 %v260, %v261
        %v263 = vrot.slane %v262, 1
        %v264 = vadd.f32 %v262, %v263
        %v265 = vadd.f32 %v257, %v264
        %266 = vst.msk [vmem:[#allocation2] sm:$0x1] %vm247, %v265
        %p267 = scmp.eq.s32.totalorder %s21, 2
        // Predicated region
        $region33: #{tpu_custom_call.1} parent=27 // pred_check
          %p268 = pneg %p267
        $region34: #{tpu_custom_call.1} parent=27 // pred_check_branch
          %270 = sbr.rel (%p268) target = $region36
        $region35: #{tpu_custom_call.1} parent=27 // pred_region
          %v271 = vld [vmem:[#allocation2] sm:$0x1]
          %v272 = vld [vmem:[#allocation3] sm:$0x1]
          %v273 = vmul.f32 %v271, %v272
          %v274 = vsel %vm247, %v273, 0.0
          %275 = vadd.xlane.f32.xlu0 %v274
          %v276 = vpop.xlane.xlu0 %275
          %v277 = vrot.slane %v276, 4
          %v278 = vadd.f32 %v276, %v277
          %v279 = vrot.slane %v278, 2
          %v280 = vadd.f32 %v278, %v279
          %v281 = vrot.slane %v280, 1
          %v282 = vadd.f32 %v280, %v281
          %s283 = vtos %v282
          %vm284 = vcmp.eq.s32.totalorder %v250, 0
          %v285 = vld [vmem:[#allocation4] sm:$0x1]
          %287 = vset.pattern.permute.xlu0 0
          %288 = vperm.xlu0 %287, %v285
          %v289 = vpop.permute.xlu0 %288
          %v291 = vlaneseq
          %v292 = vshrl.u32 %v291, 7
          %v293 = vsub.s32 0, %v292
          %v294 = vrot.slane %v289, %v293
          %v295 = vsel %vm284, %v294, 0.0
          %vm296 = vcmp.eq.s32.totalorder %v250, 1
          %v297 = vstv %s283
          %v298 = vsel %vm296, %v297, 0.0
          %v299 = vadd.f32 %v295, %v298
          %300 = vst [vmem:[%s178] sm:$0x1] %v299
        $region36: #{tpu_custom_call.1} parent=27 // pred_fallthru
          _
        %s301 = sand.u32 %s92, 1
        %s302 = scalar_lea.sflag [#allocation6], %s301
        %s303 = sand.u32 %s92, 1
        %s304 = scalar_lea.vmem [#allocation5], %s303
        // Predicated region
        $region37: #{tpu_custom_call.1} parent=27 // pred_check
          %p305 = pneg %p102
        $region38: #{tpu_custom_call.1} parent=27 // pred_check_branch
          %307 = sbr.rel (%p305) target = $region40
        $region39: #{tpu_custom_call.1} parent=27 // pred_region
          %s309 = ssub.s32 16, 16
          %310 = vsyncadd %s302, %s309
          %s311 = smul.addr %s20, 16
          %s312 = scalar_lea.hbm %s2, %s311
          %s314 = sshll.u32 %s304, 4
          %s315 = int_to_ptr.vmem [resolvable:$true] %s314
          %317 = dma.vmem_to_hbm [thread:$0]  %s315, 16, %s312, %s302
        $region40: #{tpu_custom_call.1} parent=27 // pred_fallthru
          _
      $region28: #{tpu_custom_call.1} parent=5 // pred_fallthru
        _
      %p318 = scmp.le.s32.totalorder 2, %s11
      // Predicated region
      $region41: #{tpu_custom_call.1} parent=5 // pred_check
        %p319 = pneg %p318
      $region42: #{tpu_custom_call.1} parent=5 // pred_check_branch
        %321 = sbr.rel (%p319) target = $region44
      $region43: #{tpu_custom_call.1} parent=5 // pred_region
        %s322 = ssub.s32 %s11, 2
        // Predicated region
        $region45: #{tpu_custom_call.1} parent=43 // pred_check
          %p323 = pneg %p108
        $region46: #{tpu_custom_call.1} parent=43 // pred_check_branch
          %325 = sbr.rel (%p323) target = $region48
        $region47: #{tpu_custom_call.1} parent=43 // pred_region
          %s326 = sand.u32 %s93, 1
          %s327 = scalar_lea.sflag [#allocation6], %s326
          %s328 = sand.u32 %s93, 1
          %s329 = scalar_lea.vmem [#allocation5], %s328
          %330 = dma.done %s327, 16
        $region48: #{tpu_custom_call.1} parent=43 // pred_fallthru
          _
      $region44: #{tpu_custom_call.1} parent=5 // pred_fallthru
        _
    $region6: #{tpu_custom_call.1} parent=1 // loop_footer
      %s15 = sadd.s32 1, %s11
    $region7: #{tpu_custom_call.1} parent=1 // loop_footer_branch
      %10 = sbr.rel target = $region3
    $region8: #{tpu_custom_call.1} parent=1 // loop_exit
      _
    %331 = vsyncpa [#allocation6], 1
    %s332 = scalar_lea.sflag [#allocation6], 1
    %333 = vsyncpa %s332, 1

</llo_original>
